<compile_context>
chip_gen: v6e
topology: v6e:2x2x1
jax: 0.10.0
libtpu: 0.0.40
codegen_flags: <defaults>
</compile_context>

<pallas_src>
import math

import jax
import jax.numpy as jnp
from jax import lax
from jax.experimental import pallas as pl
from jax.experimental.pallas import tpu as pltpu


def _make_kernel(n_rows, d, block_rows, sub_rows, acc_rows, steps_per_split):
    """Builds the partial-reduction kernel for (block_rows, d) input tiles."""
    n_sub = block_rows // sub_rows

    def _fold_sum(x):
        if x.shape[0] == acc_rows:
            return x
        # Splits the sublane axis on aligned boundaries; the axis-0 reduce is a
        # chain of elementwise VPU adds, not an XLU cross-lane reduce.
        return jnp.sum(x.reshape(x.shape[0] // acc_rows, acc_rows, d), axis=0)

    def _fold_max(x):
        if x.shape[0] == acc_rows:
            return x
        return jnp.max(x.reshape(x.shape[0] // acc_rows, acc_rows, d), axis=0)

    def _accumulate(yt, yp, sq_ref, gate_ref):
        # Gate folds in the native dtype (bf16 stays half-width on v6e/v7x);
        # |x + 1| == 0  <=>  x == -1 exactly, also in bf16.
        gt = jnp.abs(yt + jnp.asarray(1, yt.dtype))
        gp = jnp.abs(yp + jnp.asarray(1, yp.dtype))
        # Only the squared-diff path upcasts to f32.
        diff = yt.astype(jnp.float32) - yp.astype(jnp.float32)
        sq_ref[...] += _fold_sum(diff * diff)
        gate_ref[0] = jnp.maximum(gate_ref[0], _fold_max(gt).astype(jnp.float32))
        gate_ref[1] = jnp.maximum(gate_ref[1], _fold_max(gp).astype(jnp.float32))

    def kernel(yt_ref, yp_ref, sq_ref, gate_ref):
        c = pl.program_id(0)   # row-range split (one per TC on v7x)
        i = pl.program_id(1)   # reduction step within the split

        @pl.when(i == 0)
        def _init():
            sq_ref[...] = jnp.zeros_like(sq_ref)
            gate_ref[...] = jnp.zeros_like(gate_ref)

        block_idx = c * steps_per_split + i
        rows_left = n_rows - block_idx * block_rows   # i32 scalar

        # Interior blocks: every row valid, no masking on the hot path.
        @pl.when(rows_left >= block_rows)
        def _full():
            if n_sub == 1:
                _accumulate(yt_ref[...], yp_ref[...], sq_ref, gate_ref)
            else:
                def body(j, carry):
                    r0 = pl.multiple_of(j * sub_rows, sub_rows)
                    _accumulate(yt_ref[pl.ds(r0, sub_rows), :],
                                yp_ref[pl.ds(r0, sub_rows), :],
                                sq_ref, gate_ref)
                    return carry
                lax.fori_loop(0, n_sub, body, 0)

        # Ragged last block: mask rows >= n_rows to -1, which is neutral for
        # both accumulators (diff == 0 and |x + 1| == 0).  Fully out-of-range
        # duplicate blocks (from the clamped index_map when the block count
        # doesn't split evenly) have rows_left <= 0 and are skipped entirely.
        @pl.when(jnp.logical_and(rows_left > 0, rows_left < block_rows))
        def _partial():
            def body(j, carry):
                r0 = pl.multiple_of(j * sub_rows, sub_rows)
                yt = yt_ref[pl.ds(r0, sub_rows), :]
                yp = yp_ref[pl.ds(r0, sub_rows), :]
                rows = r0 + lax.broadcasted_iota(jnp.int32, (sub_rows, d), 0)
                valid = rows < rows_left
                yt = jnp.where(valid, yt, jnp.asarray(-1, yt.dtype))
                yp = jnp.where(valid, yp, jnp.asarray(-1, yp.dtype))
                _accumulate(yt, yp, sq_ref, gate_ref)
                return carry
            lax.fori_loop(0, n_sub, body, 0)

    return kernel


def _row_alignment(dtype) -> int:
    # Sublane packing of the second-minor dim: 8 (f32), 16 (bf16), 32 (int8).
    return {4: 8, 2: 16, 1: 32}.get(jnp.dtype(dtype).itemsize, 8)


def _device_defaults():
    """(num_row_splits, per-input block byte budget, vmem_limit_bytes)."""
    try:
        kind = jax.devices()[0].device_kind.lower()
    except Exception:
        kind = ""
    if "v7" in kind or "tpu7" in kind:
        # 2 TensorCores per chip, but only 64 MiB physical VMEM per core.
        return 2, 2 << 20, 32 << 20
    # v5e / v6e (1 TensorCore, 128 MiB VMEM) and anything unknown.
    return 1, 4 << 20, 64 << 20


def custom_value_distance_loss(y_true, y_pred, *,
                               target_block_bytes=None,
                               num_row_splits=None):
    """0.5 * mean((y_true - y_pred)^2); 0 if either input is entirely -1."""
    y_true = jnp.asarray(y_true)
    y_pred = jnp.asarray(y_pred)
    assert y_true.shape == y_pred.shape, (y_true.shape, y_pred.shape)
    total_elems = math.prod(y_true.shape)
    assert total_elems > 0

    # Layout normalization (semantics-preserving: the reduction is over all
    # elements).  Keep the native (rows, D) layout when D is already a modest
    # lane multiple (reshaping would force an XLA relayout copy); otherwise
    # fold to a lane-dense (total/128, 128) slab when exact, else a single row.
    lane_dense = (y_true.ndim == 2 and y_true.shape[1] % 128 == 0
                  and y_true.shape[1] * y_true.dtype.itemsize <= (1 << 20))
    if lane_dense:
        pass
    elif total_elems % 128 == 0:
        y_true = y_true.reshape(total_elems // 128, 128)
        y_pred = y_pred.reshape(total_elems // 128, 128)
    elif y_true.ndim != 2:
        y_true = y_true.reshape(1, total_elems)
        y_pred = y_pred.reshape(1, total_elems)
    n_rows, d = y_true.shape

    itemsize = max(y_true.dtype.itemsize, y_pred.dtype.itemsize)
    row_align = max(_row_alignment(y_true.dtype), _row_alignment(y_pred.dtype))

    dev_splits, dev_block_bytes, vmem_limit = _device_defaults()
    num_row_splits = dev_splits if num_row_splits is None else num_row_splits
    target_block_bytes = (dev_block_bytes if target_block_bytes is None
                          else target_block_bytes)

    # Inner-loop sub-slice: ~32K elements (~128 KiB of f32 temporaries), so the
    # per-block compute never materializes block-sized f32 intermediates.
    sub_rows = max(row_align, ((32 * 1024) // max(d, 1)) // row_align * row_align)
    sub_rows = min(sub_rows, 1024)

    if n_rows <= sub_rows:
        # Tiny input: one full-extent block (full array dims carry no (8,128)
        # tiling constraint), single grid step, no masking needed.
        block_rows = sub_rows = n_rows
    else:
        block_rows = max(target_block_bytes // max(d * itemsize, 1), sub_rows)
        block_rows = (block_rows // sub_rows) * sub_rows
        block_rows = min(block_rows, pl.cdiv(n_rows, sub_rows) * sub_rows)

    acc_rows = 8 if sub_rows % 8 == 0 else sub_rows
    total_blocks = pl.cdiv(n_rows, block_rows)
    if num_row_splits > total_blocks:
        num_row_splits = 1
    steps_per_split = pl.cdiv(total_blocks, num_row_splits)
    last_block = total_blocks - 1

    kernel = _make_kernel(n_rows, d, block_rows, sub_rows, acc_rows,
                          steps_per_split)

    def in_index(c, i):
        # Clamp so a trailing step past the last real block never DMAs out of
        # bounds; the kernel skips such steps via rows_left <= 0.
        return (jnp.minimum(c * steps_per_split + i, last_block), 0)

    in_spec = pl.BlockSpec((block_rows, d), in_index)
    sq_spec = pl.BlockSpec((None, acc_rows, d), lambda c, i: (c, 0, 0))
    gate_spec = pl.BlockSpec((None, 2, acc_rows, d), lambda c, i: (c, 0, 0, 0))

    sq_part, gate_part = pl.pallas_call(
        kernel,
        out_shape=(
            jax.ShapeDtypeStruct((num_row_splits, acc_rows, d), jnp.float32),
            jax.ShapeDtypeStruct((num_row_splits, 2, acc_rows, d), jnp.float32),
        ),
        grid_spec=pltpu.PrefetchScalarGridSpec(
            num_scalar_prefetch=0,
            grid=(num_row_splits, steps_per_split),
            in_specs=[in_spec, in_spec],
            out_specs=(sq_spec, gate_spec),
        ),
        compiler_params=pltpu.CompilerParams(
            # Leading axis: independent row ranges (meant to land one per
            # TensorCore on v7x; a length-1 loop on v5e/v6e).  If an xprof
            # trace shows a single v7x core doing all steps, switch this axis
            # to pltpu.CORE_PARALLEL.  Trailing axis: sequential reduction.
            dimension_semantics=("parallel", "arbitrary"),
            vmem_limit_bytes=vmem_limit,
        ),
    )(y_true, y_pred)

    # Tiny final combine (a few KiB) in plain JAX.
    sum_sq = jnp.sum(sq_part)
    gate = jnp.logical_or(jnp.max(gate_part[:, 0]) == 0.0,
                          jnp.max(gate_part[:, 1]) == 0.0)
    loss = 0.5 * sum_sq / jnp.float32(total_elems)
    # PyTorch returns the python int 0 on the gated path; we return f32 0.0.
    return jnp.where(gate, jnp.float32(0.0), loss)


def _reference(y_true, y_pred):
    y_true = jnp.asarray(y_true, jnp.float32)
    y_pred = jnp.asarray(y_pred, jnp.float32)
    gate = jnp.logical_or(jnp.all(y_true == -1.0), jnp.all(y_pred == -1.0))
    loss = 0.5 * jnp.mean((y_true - y_pred) ** 2)
    return jnp.where(gate, jnp.float32(0.0), loss)


def _check(name, got, want, rtol=1e-5, atol=1e-6):
    got = jax.block_until_ready(got)
    assert jnp.allclose(got, want, rtol=rtol, atol=atol), (name, got, want)


if __name__ == "__main__":
    key = jax.random.PRNGKey(0)
    k1, k2, k3, k4 = jax.random.split(key, 4)

    # 1) Small lane-dense case (single-block path).
    N, D = 64, 128
    y_true = jax.random.normal(k1, (N, D), dtype=jnp.float32)
    y_pred = jax.random.normal(k2, (N, D), dtype=jnp.float32)
    _check("basic", custom_value_distance_loss(y_true, y_pred),
           _reference(y_true, y_pred))

    # 2) Gated path: an input that is entirely -1 -> loss 0.
    _check("gated",
           custom_value_distance_loss(jnp.full((N, D), -1.0, jnp.float32), y_pred),
           jnp.float32(0.0))

    # 3) Exact PyTorch scalar semantics (0-d inputs): 0.5*(3-5)^2 = 2.
    _check("scalar",
           custom_value_distance_loss(jnp.float32(3.0), jnp.float32(5.0)),
           jnp.float32(2.0))
    _check("scalar_gated",
           custom_value_distance_loss(jnp.float32(-1.0), jnp.float32(5.0)),
           jnp.float32(0.0))

    # 4) Multi-block grid with a ragged (masked) last block and an odd block
    #    count across 2 row splits (exercises the clamp/skip path).
    N3 = 600
    yt3 = jax.random.normal(k3, (N3, D), dtype=jnp.float32)
    yp3 = jax.random.normal(k4, (N3, D), dtype=jnp.float32)
    _check("ragged_multiblock",
           custom_value_distance_loss(yt3, yp3, target_block_bytes=64 << 10,
                                      num_row_splits=2),
           _reference(yt3, yp3))

    # 5) bf16 stays bf16 on the wire; gate folds run in bf16, diff^2 in f32.
    _check("bf16",
           custom_value_distance_loss(y_true.astype(jnp.bfloat16),
                                      y_pred.astype(jnp.bfloat16)),
           _reference(y_true.astype(jnp.bfloat16), y_pred.astype(jnp.bfloat16)),
           rtol=1e-4, atol=1e-5)

    # 6) Narrow last dim -> lane-dense reshape path.
    _check("narrow_d",
           custom_value_distance_loss(y_true[:, :32], y_pred[:, :32]),
           _reference(y_true[:, :32], y_pred[:, :32]))

    print("KERNEL_OK")
</pallas_src>

<mosaic_0001>
module attributes {stable_mosaic.version = 11 : i64} {
  func.func @kernel(%arg0: i32, %arg1: i32, %arg2: memref<64x128xf32, #tpu.memory_space<vmem>>, %arg3: memref<64x128xf32, #tpu.memory_space<vmem>>, %arg4: memref<1x8x128xf32, #tpu.memory_space<vmem>>, %arg5: memref<1x2x8x128xf32, #tpu.memory_space<vmem>>) attributes {dimension_semantics = [#tpu.dimension_semantics<parallel>, #tpu.dimension_semantics<arbitrary>], iteration_bounds = array<i64: 1, 1>, scalar_prefetch = 0 : i64, scratch_operands = 0 : i64, tpu.core_type = #tpu.core_type<tc>, window_params = [{transform_indices = @transform_0, window_bounds = array<i64: 64, 128>}, {transform_indices = @transform_1, window_bounds = array<i64: 64, 128>}, {transform_indices = @transform_2, window_bounds = array<i64: 1, 8, 128>}, {transform_indices = @transform_3, window_bounds = array<i64: 1, 2, 8, 128>}]} {
    %c0_i32 = arith.constant 0 : i32
    %0 = arith.cmpi eq, %arg1, %c0_i32 : i32
    %1 = arith.extui %0 : i1 to i32
    %c0_i32_0 = arith.constant 0 : i32
    %2 = arith.cmpi ne, %1, %c0_i32_0 : i32
    scf.if %2 {
      %cst = arith.constant 0.000000e+00 : f32
      %15 = vector.broadcast %cst : f32 to vector<8x128xf32>
      %c0 = arith.constant 0 : index
      %c0_7 = arith.constant 0 : index
      %c0_8 = arith.constant 0 : index
      %16 = vector.load %arg4[%c0, %c0_7, %c0_8] : memref<1x8x128xf32, #tpu.memory_space<vmem>>, vector<1x8x128xf32>
      %17 = vector.shape_cast %16 : vector<1x8x128xf32> to vector<8x128xf32>
      %18 = vector.shape_cast %15 : vector<8x128xf32> to vector<1x8x128xf32>
      tpu.vector_store %arg4[%c0, %c0_7, %c0_8], %18 {strides = array<i32>} : memref<1x8x128xf32, #tpu.memory_space<vmem>>, vector<1x8x128xf32>,
      %cst_9 = arith.constant 0.000000e+00 : f32
      %19 = vector.broadcast %cst_9 : f32 to vector<2x8x128xf32>
      %c0_10 = arith.constant 0 : index
      %c0_11 = arith.constant 0 : index
      %c0_12 = arith.constant 0 : index
      %c0_13 = arith.constant 0 : index
      %20 = vector.load %arg5[%c0_10, %c0_11, %c0_12, %c0_13] : memref<1x2x8x128xf32, #tpu.memory_space<vmem>>, vector<1x2x8x128xf32>
      %21 = vector.shape_cast %20 : vector<1x2x8x128xf32> to vector<2x8x128xf32>
      %22 = vector.shape_cast %19 : vector<2x8x128xf32> to vector<1x2x8x128xf32>
      tpu.vector_store %arg5[%c0_10, %c0_11, %c0_12, %c0_13], %22 {strides = array<i32>} : memref<1x2x8x128xf32, #tpu.memory_space<vmem>>, vector<1x2x8x128xf32>,
    } else {
    }
    %c1_i32 = arith.constant 1 : i32
    %3 = arith.muli %arg0, %c1_i32 : i32
    %4 = arith.addi %3, %arg1 : i32
    %c64_i32 = arith.constant 64 : i32
    %5 = arith.muli %4, %c64_i32 : i32
    %c64_i32_1 = arith.constant 64 : i32
    %6 = arith.subi %c64_i32_1, %5 : i32
    %c64_i32_2 = arith.constant 64 : i32
    %7 = arith.cmpi sge, %6, %c64_i32_2 : i32
    %8 = arith.extui %7 : i1 to i32
    %c0_i32_3 = arith.constant 0 : i32
    %9 = arith.cmpi ne, %8, %c0_i32_3 : i32
    scf.if %9 {
      %c0 = arith.constant 0 : index
      %c0_7 = arith.constant 0 : index
      %15 = vector.load %arg2[%c0, %c0_7] : memref<64x128xf32, #tpu.memory_space<vmem>>, vector<64x128xf32>
      %c0_8 = arith.constant 0 : index
      %c0_9 = arith.constant 0 : index
      %16 = vector.load %arg3[%c0_8, %c0_9] : memref<64x128xf32, #tpu.memory_space<vmem>>, vector<64x128xf32>
      %cst = arith.constant 1.000000e+00 : f32
      %17 = vector.broadcast %cst : f32 to vector<64x128xf32>
      %18 = arith.addf %15, %17 : vector<64x128xf32>
      %19 = math.absf %18 : vector<64x128xf32>
      %cst_10 = arith.constant 1.000000e+00 : f32
      %20 = vector.broadcast %cst_10 : f32 to vector<64x128xf32>
      %21 = arith.addf %16, %20 : vector<64x128xf32>
      %22 = math.absf %21 : vector<64x128xf32>
      %23 = arith.subf %15, %16 : vector<64x128xf32>
      %c0_11 = arith.constant 0 : index
      %c0_12 = arith.constant 0 : index
      %c0_13 = arith.constant 0 : index
      %24 = vector.load %arg4[%c0_11, %c0_12, %c0_13] : memref<1x8x128xf32, #tpu.memory_space<vmem>>, vector<1x8x128xf32>
      %25 = vector.shape_cast %24 : vector<1x8x128xf32> to vector<8x128xf32>
      %26 = arith.mulf %23, %23 : vector<64x128xf32>
      %27 = vector.shape_cast %26 : vector<64x128xf32> to vector<8x8x128xf32>
      %cst_14 = arith.constant dense<0.000000e+00> : vector<8x128xf32>
      %28 = vector.multi_reduction <add>, %27, %cst_14 [0] : vector<8x8x128xf32> to vector<8x128xf32>
      %29 = arith.addf %25, %28 : vector<8x128xf32>
      %c0_15 = arith.constant 0 : index
      %c0_16 = arith.constant 0 : index
      %c0_17 = arith.constant 0 : index
      %30 = vector.load %arg4[%c0_15, %c0_16, %c0_17] : memref<1x8x128xf32, #tpu.memory_space<vmem>>, vector<1x8x128xf32>
      %31 = vector.shape_cast %30 : vector<1x8x128xf32> to vector<8x128xf32>
      %32 = vector.shape_cast %29 : vector<8x128xf32> to vector<1x8x128xf32>
      tpu.vector_store %arg4[%c0_15, %c0_16, %c0_17], %32 {strides = array<i32>} : memref<1x8x128xf32, #tpu.memory_space<vmem>>, vector<1x8x128xf32>,
      %c0_18 = arith.constant 0 : index
      %c0_19 = arith.constant 0 : index
      %c0_20 = arith.constant 0 : index
      %c0_21 = arith.constant 0 : index
      %33 = vector.load %arg5[%c0_18, %c0_19, %c0_20, %c0_21] : memref<1x2x8x128xf32, #tpu.memory_space<vmem>>, vector<1x1x8x128xf32>
      %34 = vector.shape_cast %33 : vector<1x1x8x128xf32> to vector<8x128xf32>
      %35 = vector.shape_cast %19 : vector<64x128xf32> to vector<8x8x128xf32>
      %cst_22 = arith.constant dense<0xFF800000> : vector<8x128xf32>
      %36 = vector.multi_reduction <maximumf>, %35, %cst_22 [0] : vector<8x8x128xf32> to vector<8x128xf32>
      %37 = arith.maximumf %34, %36 : vector<8x128xf32>
      %c0_23 = arith.constant 0 : index
      %c0_24 = arith.constant 0 : index
      %c0_25 = arith.constant 0 : index
      %c0_26 = arith.constant 0 : index
      %38 = vector.load %arg5[%c0_23, %c0_24, %c0_25, %c0_26] : memref<1x2x8x128xf32, #tpu.memory_space<vmem>>, vector<1x1x8x128xf32>
      %39 = vector.shape_cast %38 : vector<1x1x8x128xf32> to vector<8x128xf32>
      %40 = vector.shape_cast %37 : vector<8x128xf32> to vector<1x1x8x128xf32>
      tpu.vector_store %arg5[%c0_23, %c0_24, %c0_25, %c0_26], %40 {strides = array<i32>} : memref<1x2x8x128xf32, #tpu.memory_space<vmem>>, vector<1x1x8x128xf32>,
      %c0_27 = arith.constant 0 : index
      %c1 = arith.constant 1 : index
      %c0_28 = arith.constant 0 : index
      %c0_29 = arith.constant 0 : index
      %41 = vector.load %arg5[%c0_27, %c1, %c0_28, %c0_29] : memref<1x2x8x128xf32, #tpu.memory_space<vmem>>, vector<1x1x8x128xf32>
      %42 = vector.shape_cast %41 : vector<1x1x8x128xf32> to vector<8x128xf32>
      %43 = vector.shape_cast %22 : vector<64x128xf32> to vector<8x8x128xf32>
      %cst_30 = arith.constant dense<0xFF800000> : vector<8x128xf32>
      %44 = vector.multi_reduction <maximumf>, %43, %cst_30 [0] : vector<8x8x128xf32> to vector<8x128xf32>
      %45 = arith.maximumf %42, %44 : vector<8x128xf32>
      %c0_31 = arith.constant 0 : index
      %c1_32 = arith.constant 1 : index
      %c0_33 = arith.constant 0 : index
      %c0_34 = arith.constant 0 : index
      %46 = vector.load %arg5[%c0_31, %c1_32, %c0_33, %c0_34] : memref<1x2x8x128xf32, #tpu.memory_space<vmem>>, vector<1x1x8x128xf32>
      %47 = vector.shape_cast %46 : vector<1x1x8x128xf32> to vector<8x128xf32>
      %48 = vector.shape_cast %45 : vector<8x128xf32> to vector<1x1x8x128xf32>
      tpu.vector_store %arg5[%c0_31, %c1_32, %c0_33, %c0_34], %48 {strides = array<i32>} : memref<1x2x8x128xf32, #tpu.memory_space<vmem>>, vector<1x1x8x128xf32>,
    } else {
    }
    %c0_i32_4 = arith.constant 0 : i32
    %10 = arith.cmpi sgt, %6, %c0_i32_4 : i32
    %c64_i32_5 = arith.constant 64 : i32
    %11 = arith.cmpi slt, %6, %c64_i32_5 : i32
    %12 = arith.andi %10, %11 : i1
    %13 = arith.extui %12 : i1 to i32
    %c0_i32_6 = arith.constant 0 : i32
    %14 = arith.cmpi ne, %13, %c0_i32_6 : i32
    scf.if %14 {
      %c0_i32_7 = arith.constant 0 : i32
      %c64_i32_8 = arith.constant 64 : i32
      %15 = arith.muli %c0_i32_7, %c64_i32_8 : i32
      %16 = tpu.assume_multiple %15, 64 : i32
      %17 = arith.index_cast %16 : i32 to index
      %c0 = arith.constant 0 : index
      %18 = vector.load %arg2[%17, %c0] : memref<64x128xf32, #tpu.memory_space<vmem>>, vector<64x128xf32>
      %19 = arith.index_cast %16 : i32 to index
      %c0_9 = arith.constant 0 : index
      %20 = vector.load %arg3[%19, %c0_9] : memref<64x128xf32, #tpu.memory_space<vmem>>, vector<64x128xf32>
      %21 = tpu.iota {dimensions = array<i32: 0>} : vector<64x128xi32>
      %22 = vector.broadcast %16 : i32 to vector<64x128xi32>
      %23 = arith.addi %22, %21 : vector<64x128xi32>
      %24 = vector.broadcast %6 : i32 to vector<64x128xi32>
      %25 = arith.cmpi slt, %23, %24 : vector<64x128xi32>
      %cst = arith.constant -1.000000e+00 : f32
      %26 = vector.broadcast %cst : f32 to vector<64x128xf32>
      %27 = arith.select %25, %18, %26 : vector<64x128xi1>, vector<64x128xf32>
      %cst_10 = arith.constant -1.000000e+00 : f32
      %28 = vector.broadcast %cst_10 : f32 to vector<64x128xf32>
      %29 = arith.select %25, %20, %28 : vector<64x128xi1>, vector<64x128xf32>
      %cst_11 = arith.constant 1.000000e+00 : f32
      %30 = vector.broadcast %cst_11 : f32 to vector<64x128xf32>
      %31 = arith.addf %27, %30 : vector<64x128xf32>
      %32 = math.absf %31 : vector<64x128xf32>
      %cst_12 = arith.constant 1.000000e+00 : f32
      %33 = vector.broadcast %cst_12 : f32 to vector<64x128xf32>
      %34 = arith.addf %29, %33 : vector<64x128xf32>
      %35 = math.absf %34 : vector<64x128xf32>
      %36 = arith.subf %27, %29 : vector<64x128xf32>
      %c0_13 = arith.constant 0 : index
      %c0_14 = arith.constant 0 : index
      %c0_15 = arith.constant 0 : index
      %37 = vector.load %arg4[%c0_13, %c0_14, %c0_15] : memref<1x8x128xf32, #tpu.memory_space<vmem>>, vector<1x8x128xf32>
      %38 = vector.shape_cast %37 : vector<1x8x128xf32> to vector<8x128xf32>
      %39 = arith.mulf %36, %36 : vector<64x128xf32>
      %40 = vector.shape_cast %39 : vector<64x128xf32> to vector<8x8x128xf32>
      %cst_16 = arith.constant dense<0.000000e+00> : vector<8x128xf32>
      %41 = vector.multi_reduction <add>, %40, %cst_16 [0] : vector<8x8x128xf32> to vector<8x128xf32>
      %42 = arith.addf %38, %41 : vector<8x128xf32>
      %c0_17 = arith.constant 0 : index
      %c0_18 = arith.constant 0 : index
      %c0_19 = arith.constant 0 : index
      %43 = vector.load %arg4[%c0_17, %c0_18, %c0_19] : memref<1x8x128xf32, #tpu.memory_space<vmem>>, vector<1x8x128xf32>
      %44 = vector.shape_cast %43 : vector<1x8x128xf32> to vector<8x128xf32>
      %45 = vector.shape_cast %42 : vector<8x128xf32> to vector<1x8x128xf32>
      tpu.vector_store %arg4[%c0_17, %c0_18, %c0_19], %45 {strides = array<i32>} : memref<1x8x128xf32, #tpu.memory_space<vmem>>, vector<1x8x128xf32>,
      %c0_20 = arith.constant 0 : index
      %c0_21 = arith.constant 0 : index
      %c0_22 = arith.constant 0 : index
      %c0_23 = arith.constant 0 : index
      %46 = vector.load %arg5[%c0_20, %c0_21, %c0_22, %c0_23] : memref<1x2x8x128xf32, #tpu.memory_space<vmem>>, vector<1x1x8x128xf32>
      %47 = vector.shape_cast %46 : vector<1x1x8x128xf32> to vector<8x128xf32>
      %48 = vector.shape_cast %32 : vector<64x128xf32> to vector<8x8x128xf32>
      %cst_24 = arith.constant dense<0xFF800000> : vector<8x128xf32>
      %49 = vector.multi_reduction <maximumf>, %48, %cst_24 [0] : vector<8x8x128xf32> to vector<8x128xf32>
      %50 = arith.maximumf %47, %49 : vector<8x128xf32>
      %c0_25 = arith.constant 0 : index
      %c0_26 = arith.constant 0 : index
      %c0_27 = arith.constant 0 : index
      %c0_28 = arith.constant 0 : index
      %51 = vector.load %arg5[%c0_25, %c0_26, %c0_27, %c0_28] : memref<1x2x8x128xf32, #tpu.memory_space<vmem>>, vector<1x1x8x128xf32>
      %52 = vector.shape_cast %51 : vector<1x1x8x128xf32> to vector<8x128xf32>
      %53 = vector.shape_cast %50 : vector<8x128xf32> to vector<1x1x8x128xf32>
      tpu.vector_store %arg5[%c0_25, %c0_26, %c0_27, %c0_28], %53 {strides = array<i32>} : memref<1x2x8x128xf32, #tpu.memory_space<vmem>>, vector<1x1x8x128xf32>,
      %c0_29 = arith.constant 0 : index
      %c1 = arith.constant 1 : index
      %c0_30 = arith.constant 0 : index
      %c0_31 = arith.constant 0 : index
      %54 = vector.load %arg5[%c0_29, %c1, %c0_30, %c0_31] : memref<1x2x8x128xf32, #tpu.memory_space<vmem>>, vector<1x1x8x128xf32>
      %55 = vector.shape_cast %54 : vector<1x1x8x128xf32> to vector<8x128xf32>
      %56 = vector.shape_cast %35 : vector<64x128xf32> to vector<8x8x128xf32>
      %cst_32 = arith.constant dense<0xFF800000> : vector<8x128xf32>
      %57 = vector.multi_reduction <maximumf>, %56, %cst_32 [0] : vector<8x8x128xf32> to vector<8x128xf32>
      %58 = arith.maximumf %55, %57 : vector<8x128xf32>
      %c0_33 = arith.constant 0 : index
      %c1_34 = arith.constant 1 : index
      %c0_35 = arith.constant 0 : index
      %c0_36 = arith.constant 0 : index
      %59 = vector.load %arg5[%c0_33, %c1_34, %c0_35, %c0_36] : memref<1x2x8x128xf32, #tpu.memory_space<vmem>>, vector<1x1x8x128xf32>
      %60 = vector.shape_cast %59 : vector<1x1x8x128xf32> to vector<8x128xf32>
      %61 = vector.shape_cast %58 : vector<8x128xf32> to vector<1x1x8x128xf32>
      tpu.vector_store %arg5[%c0_33, %c1_34, %c0_35, %c0_36], %61 {strides = array<i32>} : memref<1x2x8x128xf32, #tpu.memory_space<vmem>>, vector<1x1x8x128xf32>,
      %c1_i32_37 = arith.constant 1 : i32
    } else {
    }
    return
  }
  func.func @transform_0(%arg0: i32, %arg1: i32) -> (i32, i32) {
    %c1_i32 = arith.constant 1 : i32
    %0 = arith.muli %arg0, %c1_i32 : i32
    %1 = arith.addi %0, %arg1 : i32
    %c0_i32 = arith.constant 0 : i32
    %2 = arith.minsi %1, %c0_i32 : i32
    %c0_i32_0 = arith.constant 0 : i32
    %c0_i32_1 = arith.constant 0 : i32
    return %2, %c0_i32_0 : i32, i32
  }
  func.func @transform_1(%arg0: i32, %arg1: i32) -> (i32, i32) {
    %c1_i32 = arith.constant 1 : i32
    %0 = arith.muli %arg0, %c1_i32 : i32
    %1 = arith.addi %0, %arg1 : i32
    %c0_i32 = arith.constant 0 : i32
    %2 = arith.minsi %1, %c0_i32 : i32
    %c0_i32_0 = arith.constant 0 : i32
    %c0_i32_1 = arith.constant 0 : i32
    return %2, %c0_i32_0 : i32, i32
  }
  func.func @transform_2(%arg0: i32, %arg1: i32) -> (i32, i32, i32) {
    %c0_i32 = arith.constant 0 : i32
    %c0_i32_0 = arith.constant 0 : i32
    %c0_i32_1 = arith.constant 0 : i32
    return %arg0, %c0_i32, %c0_i32_0 : i32, i32, i32
  }
  func.func @transform_3(%arg0: i32, %arg1: i32) -> (i32, i32, i32, i32) {
    %c0_i32 = arith.constant 0 : i32
    %c0_i32_0 = arith.constant 0 : i32
    %c0_i32_1 = arith.constant 0 : i32
    %c0_i32_2 = arith.constant 0 : i32
    return %arg0, %c0_i32, %c0_i32_0, %c0_i32_1 : i32, i32, i32, i32
  }
}

</mosaic_0001>

<llo_original>
// kernel: tpu_custom_call.1
$region0: #{tpu_custom_call.1}
  #allocation0 [shape = 'u32[]', space=smem, size = 0x4, offset = 0x4, fixed_abs, tag = 'smem constant byte address 0x4 - core index']
  #allocation1 [shape = 'u32[144,128]{1,0:T(1,128)}', space=vmem, size = 0x12000, scoped, tag = 'internal scratch']
  %s0 = inlined_call_operand.hbm [shape: f32[64,128], index: 0, kind: input, shape index: {}]
  %s1 = inlined_call_operand.hbm [shape: f32[64,128], index: 1, kind: input, shape index: {}]
  %s2 = inlined_call_operand.hbm [shape: f32[1,8,128], index: 2, kind: output, shape index: {0}]
  %s3 = inlined_call_operand.hbm [shape: f32[1,2,8,128], index: 3, kind: output, shape index: {1}]
  %4 = xla_tuple %s2, %s3
  %s5 = sld [smem:[#allocation0]]
  $region46: #{tpu_custom_call.1} parent=0
    _
  %s7 = ssub.s32 1, %s5
  %s8 = scalar_select 0, %s7, %s5
  $region1: #{tpu_custom_call.1} parent=0
    #allocation2 [shape = 'u8[32768]{0}', space=vmem, size = 0x8000, scoped, tag = 'input window, operand 0, single buffered']
    #allocation3 [shape = 's32[1]{0}', space=sflag, size = 0x4, scoped, tag = 'scoped memory for tpu_custom_call.1']
    #allocation4 [shape = 's32[1]{0}', space=sflag, size = 0x4, scoped, tag = 'scoped memory for tpu_custom_call.1']
    #allocation5 [shape = 'u8[32768]{0}', space=vmem, size = 0x8000, scoped, tag = 'input window, operand 1, single buffered']
    #allocation6 [shape = 's32[1]{0}', space=sflag, size = 0x4, scoped, tag = 'scoped memory for tpu_custom_call.1']
    #allocation7 [shape = 'u8[4096]{0}', space=vmem, size = 0x1000, scoped, tag = 'output window, operand 0, single buffered']
    #allocation8 [shape = 'u8[8192]{0}', space=vmem, size = 0x2000, scoped, tag = 'output window, operand 1, single buffered']
    #allocation9 [shape = 's32[1]{0}', space=sflag, size = 0x4, scoped, tag = 'scoped memory for tpu_custom_call.1']
    %9 = vsyncpa [#allocation3], 0
    %10 = vsyncpa [#allocation6], 0
    %11 = vsyncpa [#allocation4], 0
    %12 = vsyncpa [#allocation9], 0
    // Predicated region
    $region2: #{tpu_custom_call.1} parent=1 // pred_check
      _
    $region3: #{tpu_custom_call.1} parent=1 // pred_check_branch
      %14 = sbr.rel (0) target = $region5
    $region4: #{tpu_custom_call.1} parent=1 // pred_region
      %s15 = sadd.s32 0, 0
      %p16 = scmp.lt.s32.totalorder %s15, 0
      %s17 = scalar_select %p16, %s15, 0
      %s18 = smul.u32 8, %s17
      %s20 = ssub.s32 1024, 1024
      %21 = vsyncadd [#allocation3], %s20
      %s22 = smul.addr %s18, 128
      %s23 = scalar_lea.hbm %s0, %s22
      %s24 = sshll.u32 [#allocation2], 4
      %s25 = int_to_ptr.vmem [resolvable:$true] %s24
      %30 = dma.hbm_to_vmem [thread:$0]  %s23, 1024, %s25, [#allocation3], 128, 128, 8
    $region5: #{tpu_custom_call.1} parent=1 // pred_fallthru
      _
    // Predicated region
    $region6: #{tpu_custom_call.1} parent=1 // pred_check
      _
    $region7: #{tpu_custom_call.1} parent=1 // pred_check_branch
      %32 = sbr.rel (0) target = $region9
    $region8: #{tpu_custom_call.1} parent=1 // pred_region
      %s33 = sadd.s32 0, 0
      %p34 = scmp.lt.s32.totalorder %s33, 0
      %s35 = scalar_select %p34, %s33, 0
      %s36 = smul.u32 8, %s35
      %s38 = ssub.s32 1024, 1024
      %39 = vsyncadd [#allocation6], %s38
      %s40 = smul.addr %s36, 128
      %s41 = scalar_lea.hbm %s1, %s40
      %s42 = sshll.u32 [#allocation5], 4
      %s43 = int_to_ptr.vmem [resolvable:$true] %s42
      %48 = dma.hbm_to_vmem [thread:$0]  %s41, 1024, %s43, [#allocation6], 128, 128, 8
    $region9: #{tpu_custom_call.1} parent=1 // pred_fallthru
      _
    // Predicated region
    $region10: #{tpu_custom_call.1} parent=1 // pred_check
      _
    $region11: #{tpu_custom_call.1} parent=1 // pred_check_branch
      %50 = sbr.rel (0) target = $region13
    $region12: #{tpu_custom_call.1} parent=1 // pred_region
      %51 = dma.done [#allocation3], 1024
    $region13: #{tpu_custom_call.1} parent=1 // pred_fallthru
      _
    // Predicated region
    $region14: #{tpu_custom_call.1} parent=1 // pred_check
      _
    $region15: #{tpu_custom_call.1} parent=1 // pred_check_branch
      %53 = sbr.rel (0) target = $region17
    $region16: #{tpu_custom_call.1} parent=1 // pred_region
      %54 = dma.done [#allocation6], 1024
    $region17: #{tpu_custom_call.1} parent=1 // pred_fallthru
      _
    %s55 = sadd.s32 0, 0
    %p56 = scmp.lt.s32.totalorder %s55, 0
    %s57 = scalar_select %p56, %s55, 0
    %s58 = smul.u32 8, %s57
    %s59 = sadd.s32 0, 0
    %p60 = scmp.lt.s32.totalorder %s59, 0
    %s61 = scalar_select %p60, %s59, 0
    %s62 = smul.u32 8, %s61
    %p63 = scmp.eq.s32.totalorder 0, 0
    // Predicated region
    $region18: #{tpu_custom_call.1} parent=1 // pred_check
      %p64 = pneg %p63
    $region19: #{tpu_custom_call.1} parent=1 // pred_check_branch
      %66 = sbr.rel (%p64) target = $region21
    $region20: #{tpu_custom_call.1} parent=1 // pred_region
      %67 = vst [vmem:[#allocation7] sm:$0xff] 0.0
      %68 = vst [vmem:[#allocation8] sm:$0xff] 0.0
      %69 = vst [vmem:[#allocation8 + $0x8] sm:$0xff] 0.0
    $region21: #{tpu_custom_call.1} parent=1 // pred_fallthru
      _
    %s70 = sadd.s32 0, 0
    %s71 = smul.u32 %s70, 64
    %s72 = ssub.s32 64, %s71
    %p73 = scmp.ge.s32.totalorder %s72, 64
    // Predicated region
    $region22: #{tpu_custom_call.1} parent=1 // pred_check
      %p74 = pneg %p73
    $region23: #{tpu_custom_call.1} parent=1 // pred_check_branch
      %76 = sbr.rel (%p74) target = $region25
    $region24: #{tpu_custom_call.1} parent=1 // pred_region
      %v77 = vld [vmem:[#allocation2] sm:$0xff]
      %v78 = vld [vmem:[#allocation2 + $0x8] sm:$0xff]
      %v79 = vld [vmem:[#allocation2 + $0x10] sm:$0xff]
      %v80 = vld [vmem:[#allocation2 + $0x18] sm:$0xff]
      %v81 = vld [vmem:[#allocation2 + $0x20] sm:$0xff]
      %v82 = vld [vmem:[#allocation2 + $0x28] sm:$0xff]
      %v83 = vld [vmem:[#allocation2 + $0x30] sm:$0xff]
      %v84 = vld [vmem:[#allocation2 + $0x38] sm:$0xff]
      %v85 = vld [vmem:[#allocation5] sm:$0xff]
      %v86 = vld [vmem:[#allocation5 + $0x8] sm:$0xff]
      %v87 = vld [vmem:[#allocation5 + $0x10] sm:$0xff]
      %v88 = vld [vmem:[#allocation5 + $0x18] sm:$0xff]
      %v89 = vld [vmem:[#allocation5 + $0x20] sm:$0xff]
      %v90 = vld [vmem:[#allocation5 + $0x28] sm:$0xff]
      %v91 = vld [vmem:[#allocation5 + $0x30] sm:$0xff]
      %v92 = vld [vmem:[#allocation5 + $0x38] sm:$0xff]
      %v93 = vadd.f32 %v77, 1.0
      %v94 = vadd.f32 %v78, 1.0
      %v95 = vadd.f32 %v79, 1.0
      %v96 = vadd.f32 %v80, 1.0
      %v97 = vadd.f32 %v81, 1.0
      %v98 = vadd.f32 %v82, 1.0
      %v99 = vadd.f32 %v83, 1.0
      %v100 = vadd.f32 %v84, 1.0
      %v101 = vand.u32 2147483647, %v93
      %v102 = vand.u32 2147483647, %v94
      %v103 = vand.u32 2147483647, %v95
      %v104 = vand.u32 2147483647, %v96
      %v105 = vand.u32 2147483647, %v97
      %v106 = vand.u32 2147483647, %v98
      %v107 = vand.u32 2147483647, %v99
      %v108 = vand.u32 2147483647, %v100
      %v109 = vadd.f32 %v85, 1.0
      %v110 = vadd.f32 %v86, 1.0
      %v111 = vadd.f32 %v87, 1.0
      %v112 = vadd.f32 %v88, 1.0
      %v113 = vadd.f32 %v89, 1.0
      %v114 = vadd.f32 %v90, 1.0
      %v115 = vadd.f32 %v91, 1.0
      %v116 = vadd.f32 %v92, 1.0
      %v117 = vand.u32 2147483647, %v109
      %v118 = vand.u32 2147483647, %v110
      %v119 = vand.u32 2147483647, %v111
      %v120 = vand.u32 2147483647, %v112
      %v121 = vand.u32 2147483647, %v113
      %v122 = vand.u32 2147483647, %v114
      %v123 = vand.u32 2147483647, %v115
      %v124 = vand.u32 2147483647, %v116
      %v125 = vsub.f32 %v77, %v85
      %v126 = vsub.f32 %v78, %v86
      %v127 = vsub.f32 %v79, %v87
      %v128 = vsub.f32 %v80, %v88
      %v129 = vsub.f32 %v81, %v89
      %v130 = vsub.f32 %v82, %v90
      %v131 = vsub.f32 %v83, %v91
      %v132 = vsub.f32 %v84, %v92
      %v133 = vld [vmem:[#allocation7] sm:$0xff]
      %v134 = vmul.f32 %v125, %v125
      %v135 = vmul.f32 %v126, %v126
      %v136 = vmul.f32 %v127, %v127
      %v137 = vmul.f32 %v128, %v128
      %v138 = vmul.f32 %v129, %v129
      %v139 = vmul.f32 %v130, %v130
      %v140 = vmul.f32 %v131, %v131
      %v141 = vmul.f32 %v132, %v132
      %v142 = vadd.f32 %v134, %v135
      %v143 = vadd.f32 %v142, %v136
      %v144 = vadd.f32 %v143, %v137
      %v145 = vadd.f32 %v144, %v138
      %v146 = vadd.f32 %v145, %v139
      %v147 = vadd.f32 %v146, %v140
      %v148 = vadd.f32 %v147, %v141
      %v149 = vadd.f32 %v133, %v148
      %150 = vst [vmem:[#allocation7] sm:$0xff] %v149
      %v151 = vld [vmem:[#allocation8] sm:$0xff]
      %v152 = vmax.f32 %v101, %v105
      %v153 = vmax.f32 %v102, %v106
      %v154 = vmax.f32 %v103, %v107
      %v155 = vmax.f32 %v104, %v108
      %v156 = vmax.f32 %v152, %v153
      %v157 = vmax.f32 %v154, %v155
      %v158 = vmax.f32 %v156, %v157
      %v159 = vmax.f32 %v151, %v158
      %160 = vst [vmem:[#allocation8] sm:$0xff] %v159
      %s161 = scalar_lea.vmem [#allocation8], 8
      %v162 = vld [vmem:[%s161] sm:$0xff]
      %v163 = vmax.f32 %v117, %v121
      %v164 = vmax.f32 %v118, %v122
      %v165 = vmax.f32 %v119, %v123
      %v166 = vmax.f32 %v120, %v124
      %v167 = vmax.f32 %v163, %v164
      %v168 = vmax.f32 %v165, %v166
      %v169 = vmax.f32 %v167, %v168
      %v170 = vmax.f32 %v162, %v169
      %171 = vst [vmem:[%s161] sm:$0xff] %v170
    $region25: #{tpu_custom_call.1} parent=1 // pred_fallthru
      _
    %p172 = scmp.gt.s32.totalorder %s72, 0
    %p173 = scmp.lt.s32.totalorder %s72, 64
    %p174 = pnand %p172, %p173
    %p175 = pneg %p174
    // Predicated region
    $region26: #{tpu_custom_call.1} parent=1 // pred_check
      _
    $region27: #{tpu_custom_call.1} parent=1 // pred_check_branch
      %177 = sbr.rel (%p174) target = $region29
    $region28: #{tpu_custom_call.1} parent=1 // pred_region
      %v178 = vld [vmem:[#allocation2] sm:$0xff]
      %v179 = vld [vmem:[#allocation2 + $0x8] sm:$0xff]
      %v180 = vld [vmem:[#allocation2 + $0x10] sm:$0xff]
      %v181 = vld [vmem:[#allocation2 + $0x18] sm:$0xff]
      %v182 = vld [vmem:[#allocation2 + $0x20] sm:$0xff]
      %v183 = vld [vmem:[#allocation2 + $0x28] sm:$0xff]
      %v184 = vld [vmem:[#allocation2 + $0x30] sm:$0xff]
      %v185 = vld [vmem:[#allocation2 + $0x38] sm:$0xff]
      %v186 = vld [vmem:[#allocation5] sm:$0xff]
      %v187 = vld [vmem:[#allocation5 + $0x8] sm:$0xff]
      %v188 = vld [vmem:[#allocation5 + $0x10] sm:$0xff]
      %v189 = vld [vmem:[#allocation5 + $0x18] sm:$0xff]
      %v190 = vld [vmem:[#allocation5 + $0x20] sm:$0xff]
      %v191 = vld [vmem:[#allocation5 + $0x28] sm:$0xff]
      %v192 = vld [vmem:[#allocation5 + $0x30] sm:$0xff]
      %v193 = vld [vmem:[#allocation5 + $0x38] sm:$0xff]
      %v194 = vlaneseq
      %v195 = vshrl.u32 %v194, 7
      %v196 = vadd.s32 %v195, 8
      %v197 = vadd.s32 %v195, 16
      %v198 = vadd.s32 %v195, 24
      %v199 = vadd.s32 %v195, 32
      %v200 = vadd.s32 %v195, 40
      %v201 = vadd.s32 %v195, 48
      %v202 = vadd.s32 %v195, 56
      %v203 = vstv 0
      %v204 = vadd.s32 %v203, %v195
      %v205 = vadd.s32 %v203, %v196
      %v206 = vadd.s32 %v203, %v197
      %v207 = vadd.s32 %v203, %v198
      %v208 = vadd.s32 %v203, %v199
      %v209 = vadd.s32 %v203, %v200
      %v210 = vadd.s32 %v203, %v201
      %v211 = vadd.s32 %v203, %v202
      %v212 = vstv %s72
      %vm213 = vcmp.lt.s32.totalorder %v204, %v212
      %vm214 = vcmp.lt.s32.totalorder %v205, %v212
      %vm215 = vcmp.lt.s32.totalorder %v206, %v212
      %vm216 = vcmp.lt.s32.totalorder %v207, %v212
      %vm217 = vcmp.lt.s32.totalorder %v208, %v212
      %vm218 = vcmp.lt.s32.totalorder %v209, %v212
      %vm219 = vcmp.lt.s32.totalorder %v210, %v212
      %vm220 = vcmp.lt.s32.totalorder %v211, %v212
      %v221 = vsel %vm213, %v178, -1.0
      %v222 = vsel %vm214, %v179, -1.0
      %v223 = vsel %vm215, %v180, -1.0
      %v224 = vsel %vm216, %v181, -1.0
      %v225 = vsel %vm217, %v182, -1.0
      %v226 = vsel %vm218, %v183, -1.0
      %v227 = vsel %vm219, %v184, -1.0
      %v228 = vsel %vm220, %v185, -1.0
      %v229 = vsel %vm213, %v186, -1.0
      %v230 = vsel %vm214, %v187, -1.0
      %v231 = vsel %vm215, %v188, -1.0
      %v232 = vsel %vm216, %v189, -1.0
      %v233 = vsel %vm217, %v190, -1.0
      %v234 = vsel %vm218, %v191, -1.0
      %v235 = vsel %vm219, %v192, -1.0
      %v236 = vsel %vm220, %v193, -1.0
      %v237 = vadd.f32 %v221, 1.0
      %v238 = vadd.f32 %v222, 1.0
      %v239 = vadd.f32 %v223, 1.0
      %v240 = vadd.f32 %v224, 1.0
      %v241 = vadd.f32 %v225, 1.0
      %v242 = vadd.f32 %v226, 1.0
      %v243 = vadd.f32 %v227, 1.0
      %v244 = vadd.f32 %v228, 1.0
      %v245 = vand.u32 2147483647, %v237
      %v246 = vand.u32 2147483647, %v238
      %v247 = vand.u32 2147483647, %v239
      %v248 = vand.u32 2147483647, %v240
      %v249 = vand.u32 2147483647, %v241
      %v250 = vand.u32 2147483647, %v242
      %v251 = vand.u32 2147483647, %v243
      %v252 = vand.u32 2147483647, %v244
      %v253 = vadd.f32 %v229, 1.0
      %v254 = vadd.f32 %v230, 1.0
      %v255 = vadd.f32 %v231, 1.0
      %v256 = vadd.f32 %v232, 1.0
      %v257 = vadd.f32 %v233, 1.0
      %v258 = vadd.f32 %v234, 1.0
      %v259 = vadd.f32 %v235, 1.0
      %v260 = vadd.f32 %v236, 1.0
      %v261 = vand.u32 2147483647, %v253
      %v262 = vand.u32 2147483647, %v254
      %v263 = vand.u32 2147483647, %v255
      %v264 = vand.u32 2147483647, %v256
      %v265 = vand.u32 2147483647, %v257
      %v266 = vand.u32 2147483647, %v258
      %v267 = vand.u32 2147483647, %v259
      %v268 = vand.u32 2147483647, %v260
      %v269 = vsub.f32 %v221, %v229
      %v270 = vsub.f32 %v222, %v230
      %v271 = vsub.f32 %v223, %v231
      %v272 = vsub.f32 %v224, %v232
      %v273 = vsub.f32 %v225, %v233
      %v274 = vsub.f32 %v226, %v234
      %v275 = vsub.f32 %v227, %v235
      %v276 = vsub.f32 %v228, %v236
      %v277 = vld [vmem:[#allocation7] sm:$0xff]
      %v278 = vmul.f32 %v269, %v269
      %v279 = vmul.f32 %v270, %v270
      %v280 = vmul.f32 %v271, %v271
      %v281 = vmul.f32 %v272, %v272
      %v282 = vmul.f32 %v273, %v273
      %v283 = vmul.f32 %v274, %v274
      %v284 = vmul.f32 %v275, %v275
      %v285 = vmul.f32 %v276, %v276
      %v286 = vadd.f32 %v278, %v279
      %v287 = vadd.f32 %v286, %v280
      %v288 = vadd.f32 %v287, %v281
      %v289 = vadd.f32 %v288, %v282
      %v290 = vadd.f32 %v289, %v283
      %v291 = vadd.f32 %v290, %v284
      %v292 = vadd.f32 %v291, %v285
      %v293 = vadd.f32 %v277, %v292
      %294 = vst [vmem:[#allocation7] sm:$0xff] %v293
      %v295 = vld [vmem:[#allocation8] sm:$0xff]
      %v296 = vmax.f32 %v245, %v249
      %v297 = vmax.f32 %v246, %v250
      %v298 = vmax.f32 %v247, %v251
      %v299 = vmax.f32 %v248, %v252
      %v300 = vmax.f32 %v296, %v297
      %v301 = vmax.f32 %v298, %v299
      %v302 = vmax.f32 %v300, %v301
      %v303 = vmax.f32 %v295, %v302
      %304 = vst [vmem:[#allocation8] sm:$0xff] %v303
      %s305 = scalar_lea.vmem [#allocation8], 8
      %v306 = vld [vmem:[%s305] sm:$0xff]
      %v307 = vmax.f32 %v261, %v265
      %v308 = vmax.f32 %v262, %v266
      %v309 = vmax.f32 %v263, %v267
      %v310 = vmax.f32 %v264, %v268
      %v311 = vmax.f32 %v307, %v308
      %v312 = vmax.f32 %v309, %v310
      %v313 = vmax.f32 %v311, %v312
      %v314 = vmax.f32 %v306, %v313
      %315 = vst [vmem:[%s305] sm:$0xff] %v314
    $region29: #{tpu_custom_call.1} parent=1 // pred_fallthru
      _
    // Predicated region
    $region30: #{tpu_custom_call.1} parent=1 // pred_check
      _
    $region31: #{tpu_custom_call.1} parent=1 // pred_check_branch
      %317 = sbr.rel (0) target = $region33
    $region32: #{tpu_custom_call.1} parent=1 // pred_region
      %s319 = ssub.s32 128, 128
      %320 = vsyncadd [#allocation4], %s319
      %s322 = sshll.u32 [#allocation7], 4
      %s323 = int_to_ptr.vmem [resolvable:$true] %s322
      %325 = dma.vmem_to_hbm [thread:$0]  %s323, 128, %s2, [#allocation4]
    $region33: #{tpu_custom_call.1} parent=1 // pred_fallthru
      _
    // Predicated region
    $region34: #{tpu_custom_call.1} parent=1 // pred_check
      _
    $region35: #{tpu_custom_call.1} parent=1 // pred_check_branch
      %327 = sbr.rel (0) target = $region37
    $region36: #{tpu_custom_call.1} parent=1 // pred_region
      %s329 = ssub.s32 256, 256
      %330 = vsyncadd [#allocation9], %s329
      %s331 = sshll.u32 [#allocation8], 4
      %s332 = int_to_ptr.vmem [resolvable:$true] %s331
      %337 = dma.vmem_to_hbm [thread:$0]  %s332, 256, %s3, [#allocation9], 128, 128, 8
    $region37: #{tpu_custom_call.1} parent=1 // pred_fallthru
      _
    // Predicated region
    $region38: #{tpu_custom_call.1} parent=1 // pred_check
      _
    $region39: #{tpu_custom_call.1} parent=1 // pred_check_branch
      %339 = sbr.rel (0) target = $region41
    $region40: #{tpu_custom_call.1} parent=1 // pred_region
      %340 = dma.done [#allocation4], 128
    $region41: #{tpu_custom_call.1} parent=1 // pred_fallthru
      _
    // Predicated region
    $region42: #{tpu_custom_call.1} parent=1 // pred_check
      _
    $region43: #{tpu_custom_call.1} parent=1 // pred_check_branch
      %342 = sbr.rel (0) target = $region45
    $region44: #{tpu_custom_call.1} parent=1 // pred_region
      %343 = dma.done [#allocation9], 256
    $region45: #{tpu_custom_call.1} parent=1 // pred_fallthru
      _
    %344 = vsyncpa [#allocation3], 1
    %345 = vsyncpa [#allocation6], 1
    %346 = vsyncpa [#allocation4], 1
    %347 = vsyncpa [#allocation9], 1

</llo_original>
